<compile_context>
chip_gen: v7x
topology: tpu7x:2x2x1
jax: 0.10.0
libtpu: 0.0.40
codegen_flags: <defaults>
</compile_context>

<pallas_src>
import functools

import jax
import jax.numpy as jnp
from jax import lax
from jax.experimental import pallas as pl
from jax.experimental.pallas import tpu as pltpu

IN_DIM = 4
HID_DIM = 128
OUT_DIM = 2
_AUG_ROWS = 8   # [x^T (4 rows) | ones row (fc1 bias) | 3 zero-pad rows] -> sublane aligned


def policy_kernel(x_ref, p1_ref, p2_ref, out_ref, m_ref, l_ref, *, valid_b, tile_b):
    """Two-pass kernel over batch tiles, everything in (feature, batch) layout.

    grid = (pass, batch_tile).  Pass 0: compute tile logits and accumulate the
    dim-0 softmax statistics (running per-action max / sum over batch lanes).
    Pass 1: recompute the tile logits and store exp(logits - m) / l.
    """
    p = pl.program_id(0)   # 0: statistics pass, 1: normalize/store pass
    t = pl.program_id(1)   # batch tile index

    @pl.when(jnp.logical_and(p == 0, t == 0))
    def _init():
        m_ref[...] = jnp.full(m_ref.shape, -jnp.inf, jnp.float32)
        l_ref[...] = jnp.zeros(l_ref.shape, jnp.float32)

    # fc1 (+ b1 folded in via the ones row of x_aug): (128,8) @ (8,tile_b) on
    # the MXU, f32 accumulation; ReLU on the VPU in f32.
    h = jnp.dot(p1_ref[...], x_ref[...], preferred_element_type=jnp.float32)
    h = jnp.maximum(h, 0.0)                                    # (128, tile_b) f32

    # fc2: (2,128) @ (128,tile_b).  b2 intentionally omitted: a per-action
    # (per-row) constant is removed exactly by the per-row max subtraction of
    # the dim=0 softmax below.  Do NOT reuse this if the softmax axis changes.
    logits = jnp.dot(p2_ref[...], h.astype(p2_ref.dtype),
                     preferred_element_type=jnp.float32)       # (2, tile_b) f32

    # Mask padded batch lanes so they cannot pollute the batch softmax.
    col = t * tile_b + lax.broadcasted_iota(jnp.int32, (OUT_DIM, tile_b), 1)
    logits = jnp.where(col < valid_b, logits, -jnp.inf)

    @pl.when(p == 0)
    def _stats():   # online max / sum over the batch (lane) axis
        tile_max = jnp.max(logits, axis=-1, keepdims=True)              # (2, 1)
        m_new = jnp.maximum(m_ref[...], tile_max)
        l_ref[...] = (l_ref[...] * jnp.exp(m_ref[...] - m_new)
                      + jnp.sum(jnp.exp(logits - m_new), axis=-1, keepdims=True))
        m_ref[...] = m_new

    @pl.when(p == 1)
    def _normalize():
        r = pl.reciprocal(l_ref[...], approx=True)     # EUP slot (approx 1/l)
        r = r * (2.0 - l_ref[...] * r)                 # one Newton step -> f32 accurate
        out_ref[...] = jnp.exp(logits - m_ref[...]) * r   # lane-dense store


def policy_forward(x, p1, p2, *, tile_b=128):
    """Forward pass.  x: (B, 4) f32.  p1/p2: packed params from pack_params().

    Returns softmax(fc2(relu(fc1(x))), dim=0) with shape (B, 2).
    """
    assert x.ndim == 2 and x.shape[1] == IN_DIM, "x must be (B, 4)"
    B = x.shape[0]
    dtype = p1.dtype

    if B <= 128:
        tile_b = B                                    # single full-extent lane tile
    else:
        tile_b = max(128, (tile_b // 128) * 128)      # lane-tile (128) aligned
    num_tiles = -(-B // tile_b)
    b_pad = num_tiles * tile_b

    # (feature, batch) layout with the fc1 bias folded in via a ones row; the
    # last 3 rows are padding (their p1 columns are zero).  Wrapper-side
    # transpose / pad is layout plumbing so the kernel sees lane-dense tiles.
    x_aug = jnp.zeros((_AUG_ROWS, b_pad), dtype)
    x_aug = x_aug.at[:IN_DIM, :B].set(x.T.astype(dtype))
    x_aug = x_aug.at[IN_DIM, :B].set(jnp.ones((B,), dtype))

    kernel = functools.partial(policy_kernel, valid_b=B, tile_b=tile_b)

    itemsize = jnp.dtype(dtype).itemsize
    flops = 2 * 2 * b_pad * (_AUG_ROWS * HID_DIM + HID_DIM * OUT_DIM)   # two passes
    bytes_acc = (2 * _AUG_ROWS * b_pad * itemsize            # x tiles, read twice
                 + (HID_DIM * _AUG_ROWS + OUT_DIM * HID_DIM) * itemsize
                 + 2 * OUT_DIM * b_pad * 4)                   # output writebacks

    out_t = pl.pallas_call(
        kernel,
        out_shape=jax.ShapeDtypeStruct((OUT_DIM, b_pad), jnp.float32),
        grid_spec=pltpu.PrefetchScalarGridSpec(
            num_scalar_prefetch=0,
            grid=(2, num_tiles),                              # (pass, batch tile)
            in_specs=[
                pl.BlockSpec((_AUG_ROWS, tile_b), lambda p, t: (0, t)),   # x tiles
                pl.BlockSpec((HID_DIM, _AUG_ROWS), lambda p, t: (0, 0)),  # fc1 slab (resident)
                pl.BlockSpec((OUT_DIM, HID_DIM), lambda p, t: (0, 0)),    # fc2 weight (resident)
            ],
            out_specs=pl.BlockSpec((OUT_DIM, tile_b), lambda p, t: (0, t)),
            scratch_shapes=[pltpu.VMEM((OUT_DIM, 1), jnp.float32),        # running max
                            pltpu.VMEM((OUT_DIM, 1), jnp.float32)],       # running sum
        ),
        compiler_params=pltpu.CompilerParams(
            # Both axes sequential: the dim-0 softmax couples all batch tiles
            # (pass 0 produces stats that pass 1 consumes).
            # TODO(synk): on v7x the tile axis could be "parallel" across the two
            # TensorCores only if the normalization epilogue moved outside the kernel.
            dimension_semantics=("arbitrary", "arbitrary"),
            vmem_limit_bytes=32 * 1024 * 1024,
        ),
        cost_estimate=pl.CostEstimate(flops=int(flops),
                                      transcendentals=int(4 * b_pad),
                                      bytes_accessed=int(bytes_acc)),
    )(x_aug, p1, p2)

    return out_t[:, :B].T                                     # (B, 2)


def pack_params(w1, b1, w2, b2, dtype=jnp.bfloat16):
    """Pack parameters for the transposed (feature, batch) dataflow.

    w1: (4, 128) = fc1.weight.T     b1: (128,) = fc1.bias
    w2: (128, 2) = fc2.weight.T     b2: (2,)   = fc2.bias (NOT packed: a
        per-action constant is cancelled exactly by the dim=0 softmax).

    Returns
      p1: (128, 8) = [fc1.weight | fc1.bias | zero pad]   (bias applied via the
          ones row of the augmented input)
      p2: (2, 128) = fc2.weight (native layout)
    """
    p1 = jnp.zeros((HID_DIM, _AUG_ROWS), dtype)
    p1 = p1.at[:, :IN_DIM].set(w1.T.astype(dtype))    # native fc1.weight (128, 4)
    p1 = p1.at[:, IN_DIM].set(b1.astype(dtype))
    p2 = w2.T.astype(dtype)                            # native fc2.weight (2, 128)
    del b2  # see docstring (only valid for softmax over the batch axis)
    return p1, p2


def init_params(key):
    """Deterministic init mimicking PyTorch nn.Linear (uniform +/- 1/sqrt(fan_in))."""
    k1, k2, k3, k4 = jax.random.split(key, 4)
    bound1 = 1.0 / jnp.sqrt(jnp.float32(IN_DIM))
    bound2 = 1.0 / jnp.sqrt(jnp.float32(HID_DIM))
    w1 = jax.random.uniform(k1, (IN_DIM, HID_DIM), jnp.float32, -bound1, bound1)
    b1 = jax.random.uniform(k2, (HID_DIM,), jnp.float32, -bound1, bound1)
    w2 = jax.random.uniform(k3, (HID_DIM, OUT_DIM), jnp.float32, -bound2, bound2)
    b2 = jax.random.uniform(k4, (OUT_DIM,), jnp.float32, -bound2, bound2)
    return w1, b1, w2, b2


def reference_forward(x, w1, b1, w2, b2):
    # Full f32 reference (including b2 -- the dim=0 softmax cancels it exactly).
    h = jnp.maximum(x @ w1 + b1[None, :], 0.0)
    logits = h @ w2 + b2[None, :]
    return jax.nn.softmax(logits, axis=0)   # dim=0, as in the PyTorch module


if __name__ == "__main__":
    key = jax.random.PRNGKey(0)
    kx1, kx2, kp = jax.random.split(key, 3)
    w1, b1, w2, b2 = init_params(kp)

    # --- default bf16-MXU path, multi-tile grid, ragged batch (masked tail) ----
    B1 = 200                                   # > 128 -> 2 batch tiles, last one partial
    x1 = jax.random.normal(kx1, (B1, IN_DIM), dtype=jnp.float32)
    p1_bf16, p2_bf16 = pack_params(w1, b1, w2, b2, dtype=jnp.bfloat16)
    out1 = jax.block_until_ready(policy_forward(x1, p1_bf16, p2_bf16))
    ref1 = reference_forward(x1, w1, b1, w2, b2)
    assert out1.shape == (B1, OUT_DIM)
    assert jnp.allclose(out1, ref1, atol=2e-3, rtol=5e-2), "bf16 path mismatch vs reference"
    assert jnp.allclose(jnp.sum(out1, axis=0), jnp.ones((OUT_DIM,)), atol=1e-4)

    # --- f32 path, single tile (B < 128) ---------------------------------------
    B2 = 96
    x2 = jax.random.normal(kx2, (B2, IN_DIM), dtype=jnp.float32)
    p1_f32, p2_f32 = pack_params(w1, b1, w2, b2, dtype=jnp.float32)
    out2 = jax.block_until_ready(policy_forward(x2, p1_f32, p2_f32))
    ref2 = reference_forward(x2, w1, b1, w2, b2)
    assert out2.shape == (B2, OUT_DIM)
    assert jnp.allclose(out2, ref2, atol=1e-5, rtol=1e-5), "f32 path mismatch vs reference"
    assert jnp.allclose(jnp.sum(out2, axis=0), jnp.ones((OUT_DIM,)), atol=1e-5)

    print("KERNEL_OK")
</pallas_src>

<mosaic_0001>
module attributes {stable_mosaic.version = 11 : i64} {
  func.func @policy_kernel(%arg0: i32, %arg1: i32, %arg2: memref<8x128xbf16, #tpu.memory_space<vmem>>, %arg3: memref<128x8xbf16, #tpu.memory_space<vmem>>, %arg4: memref<2x128xbf16, #tpu.memory_space<vmem>>, %arg5: memref<2x128xf32, #tpu.memory_space<vmem>>, %arg6: memref<2x1xf32, #tpu.memory_space<vmem>>, %arg7: memref<2x1xf32, #tpu.memory_space<vmem>>) attributes {dimension_semantics = [#tpu.dimension_semantics<arbitrary>, #tpu.dimension_semantics<arbitrary>], iteration_bounds = array<i64: 2, 2>, scalar_prefetch = 0 : i64, scratch_operands = 2 : i64, tpu.core_type = #tpu.core_type<tc>, window_params = [{transform_indices = @transform_0, window_bounds = array<i64: 8, 128>}, {pipeline_mode = #tpu.pipeline_mode<synchronous>, transform_indices = @transform_1, window_bounds = array<i64: 128, 8>}, {pipeline_mode = #tpu.pipeline_mode<synchronous>, transform_indices = @transform_2, window_bounds = array<i64: 2, 128>}, {transform_indices = @transform_3, window_bounds = array<i64: 2, 128>}]} {
    %c0_i32 = arith.constant 0 : i32
    %0 = arith.cmpi eq, %arg0, %c0_i32 : i32
    %c0_i32_0 = arith.constant 0 : i32
    %1 = arith.cmpi eq, %arg1, %c0_i32_0 : i32
    %2 = arith.andi %0, %1 : i1
    %3 = arith.extui %2 : i1 to i32
    %c0_i32_1 = arith.constant 0 : i32
    %4 = arith.cmpi ne, %3, %c0_i32_1 : i32
    scf.if %4 {
      %cst_13 = arith.constant 0xFF800000 : f32
      %27 = vector.broadcast %cst_13 : f32 to vector<2x1xf32>
      %c0_14 = arith.constant 0 : index
      %c0_15 = arith.constant 0 : index
      %28 = vector.load %arg6[%c0_14, %c0_15] : memref<2x1xf32, #tpu.memory_space<vmem>>, vector<2x1xf32>
      tpu.vector_store %arg6[%c0_14, %c0_15], %27 {strides = array<i32>} : memref<2x1xf32, #tpu.memory_space<vmem>>, vector<2x1xf32>,
      %cst_16 = arith.constant 0.000000e+00 : f32
      %29 = vector.broadcast %cst_16 : f32 to vector<2x1xf32>
      %c0_17 = arith.constant 0 : index
      %c0_18 = arith.constant 0 : index
      %30 = vector.load %arg7[%c0_17, %c0_18] : memref<2x1xf32, #tpu.memory_space<vmem>>, vector<2x1xf32>
      tpu.vector_store %arg7[%c0_17, %c0_18], %29 {strides = array<i32>} : memref<2x1xf32, #tpu.memory_space<vmem>>, vector<2x1xf32>,
    } else {
    }
    %c0 = arith.constant 0 : index
    %c0_2 = arith.constant 0 : index
    %5 = vector.load %arg3[%c0, %c0_2] : memref<128x8xbf16, #tpu.memory_space<vmem>>, vector<128x8xbf16>
    %c0_3 = arith.constant 0 : index
    %c0_4 = arith.constant 0 : index
    %6 = vector.load %arg2[%c0_3, %c0_4] : memref<8x128xbf16, #tpu.memory_space<vmem>>, vector<8x128xbf16>
    %cst = arith.constant dense<0.000000e+00> : vector<128x128xf32>
    %7 = tpu.matmul %5, %6, %cst {dimension_numbers = #tpu.dot_dimension_numbers<[1], [0], [0], [1], [0, 0, 1, 1], [], []>} : vector<128x8xbf16>, vector<8x128xbf16>, vector<128x128xf32> -> vector<128x128xf32>
    %cst_5 = arith.constant 0.000000e+00 : f32
    %8 = vector.broadcast %cst_5 : f32 to vector<128x128xf32>
    %9 = arith.maximumf %7, %8 : vector<128x128xf32>
    %c0_6 = arith.constant 0 : index
    %c0_7 = arith.constant 0 : index
    %10 = vector.load %arg4[%c0_6, %c0_7] : memref<2x128xbf16, #tpu.memory_space<vmem>>, vector<2x128xbf16>
    %11 = arith.truncf %9 : vector<128x128xf32> to vector<128x128xbf16>
    %cst_8 = arith.constant dense<0.000000e+00> : vector<2x128xf32>
    %12 = tpu.matmul %10, %11, %cst_8 {dimension_numbers = #tpu.dot_dimension_numbers<[1], [0], [0], [1], [0, 0, 1, 1], [], []>} : vector<2x128xbf16>, vector<128x128xbf16>, vector<2x128xf32> -> vector<2x128xf32>
    %c128_i32 = arith.constant 128 : i32
    %13 = arith.muli %arg1, %c128_i32 : i32
    %14 = tpu.iota {dimensions = array<i32: 1>} : vector<2x128xi32>
    %15 = vector.broadcast %13 : i32 to vector<2x128xi32>
    %16 = arith.addi %15, %14 : vector<2x128xi32>
    %c200_i32 = arith.constant 200 : i32
    %17 = vector.broadcast %c200_i32 : i32 to vector<2x128xi32>
    %18 = arith.cmpi slt, %16, %17 : vector<2x128xi32>
    %cst_9 = arith.constant 0xFF800000 : f32
    %19 = vector.broadcast %cst_9 : f32 to vector<2x128xf32>
    %20 = arith.select %18, %12, %19 : vector<2x128xi1>, vector<2x128xf32>
    %c0_i32_10 = arith.constant 0 : i32
    %21 = arith.cmpi eq, %arg0, %c0_i32_10 : i32
    %22 = arith.extui %21 : i1 to i32
    %c0_i32_11 = arith.constant 0 : i32
    %23 = arith.cmpi ne, %22, %c0_i32_11 : i32
    scf.if %23 {
      %cst_13 = arith.constant dense<0xFF800000> : vector<2xf32>
      %27 = vector.multi_reduction <maximumf>, %20, %cst_13 [1] : vector<2x128xf32> to vector<2xf32>
      %28 = vector.shape_cast %27 : vector<2xf32> to vector<2x1xf32>
      %c0_14 = arith.constant 0 : index
      %c0_15 = arith.constant 0 : index
      %29 = vector.load %arg6[%c0_14, %c0_15] : memref<2x1xf32, #tpu.memory_space<vmem>>, vector<2x1xf32>
      %30 = arith.maximumf %29, %28 : vector<2x1xf32>
      %c0_16 = arith.constant 0 : index
      %c0_17 = arith.constant 0 : index
      %31 = vector.load %arg7[%c0_16, %c0_17] : memref<2x1xf32, #tpu.memory_space<vmem>>, vector<2x1xf32>
      %c0_18 = arith.constant 0 : index
      %c0_19 = arith.constant 0 : index
      %32 = vector.load %arg6[%c0_18, %c0_19] : memref<2x1xf32, #tpu.memory_space<vmem>>, vector<2x1xf32>
      %33 = arith.subf %32, %30 : vector<2x1xf32>
      %34 = math.exp %33 : vector<2x1xf32>
      %35 = arith.mulf %31, %34 : vector<2x1xf32>
      %36 = vector.broadcast %30 : vector<2x1xf32> to vector<2x128xf32>
      %37 = arith.subf %20, %36 : vector<2x128xf32>
      %38 = math.exp %37 : vector<2x128xf32>
      %cst_20 = arith.constant dense<0.000000e+00> : vector<2xf32>
      %39 = vector.multi_reduction <add>, %38, %cst_20 [1] : vector<2x128xf32> to vector<2xf32>
      %40 = vector.shape_cast %39 : vector<2xf32> to vector<2x1xf32>
      %41 = arith.addf %35, %40 : vector<2x1xf32>
      %c0_21 = arith.constant 0 : index
      %c0_22 = arith.constant 0 : index
      %42 = vector.load %arg7[%c0_21, %c0_22] : memref<2x1xf32, #tpu.memory_space<vmem>>, vector<2x1xf32>
      tpu.vector_store %arg7[%c0_21, %c0_22], %41 {strides = array<i32>} : memref<2x1xf32, #tpu.memory_space<vmem>>, vector<2x1xf32>,
      %c0_23 = arith.constant 0 : index
      %c0_24 = arith.constant 0 : index
      %43 = vector.load %arg6[%c0_23, %c0_24] : memref<2x1xf32, #tpu.memory_space<vmem>>, vector<2x1xf32>
      tpu.vector_store %arg6[%c0_23, %c0_24], %30 {strides = array<i32>} : memref<2x1xf32, #tpu.memory_space<vmem>>, vector<2x1xf32>,
    } else {
    }
    %c1_i32 = arith.constant 1 : i32
    %24 = arith.cmpi eq, %arg0, %c1_i32 : i32
    %25 = arith.extui %24 : i1 to i32
    %c0_i32_12 = arith.constant 0 : i32
    %26 = arith.cmpi ne, %25, %c0_i32_12 : i32
    scf.if %26 {
      %c0_13 = arith.constant 0 : index
      %c0_14 = arith.constant 0 : index
      %27 = vector.load %arg7[%c0_13, %c0_14] : memref<2x1xf32, #tpu.memory_space<vmem>>, vector<2x1xf32>
      %28 = tpu.reciprocal %27 {approx = true} : vector<2x1xf32> -> vector<2x1xf32>
      %c0_15 = arith.constant 0 : index
      %c0_16 = arith.constant 0 : index
      %29 = vector.load %arg7[%c0_15, %c0_16] : memref<2x1xf32, #tpu.memory_space<vmem>>, vector<2x1xf32>
      %30 = arith.mulf %29, %28 : vector<2x1xf32>
      %cst_17 = arith.constant 2.000000e+00 : f32
      %31 = vector.broadcast %cst_17 : f32 to vector<2x1xf32>
      %32 = arith.subf %31, %30 : vector<2x1xf32>
      %33 = arith.mulf %28, %32 : vector<2x1xf32>
      %c0_18 = arith.constant 0 : index
      %c0_19 = arith.constant 0 : index
      %34 = vector.load %arg6[%c0_18, %c0_19] : memref<2x1xf32, #tpu.memory_space<vmem>>, vector<2x1xf32>
      %35 = vector.broadcast %34 : vector<2x1xf32> to vector<2x128xf32>
      %36 = arith.subf %20, %35 : vector<2x128xf32>
      %37 = math.exp %36 : vector<2x128xf32>
      %38 = vector.broadcast %33 : vector<2x1xf32> to vector<2x128xf32>
      %39 = arith.mulf %37, %38 : vector<2x128xf32>
      %c0_20 = arith.constant 0 : index
      %c0_21 = arith.constant 0 : index
      %40 = vector.load %arg5[%c0_20, %c0_21] : memref<2x128xf32, #tpu.memory_space<vmem>>, vector<2x128xf32>
      tpu.vector_store %arg5[%c0_20, %c0_21], %39 {strides = array<i32>} : memref<2x128xf32, #tpu.memory_space<vmem>>, vector<2x128xf32>,
    } else {
    }
    return
  }
  func.func @transform_0(%arg0: i32, %arg1: i32) -> (i32, i32) {
    %c0_i32 = arith.constant 0 : i32
    %c0_i32_0 = arith.constant 0 : i32
    return %c0_i32, %arg1 : i32, i32
  }
  func.func @transform_1(%arg0: i32, %arg1: i32) -> (i32, i32) {
    %c0_i32 = arith.constant 0 : i32
    %c0_i32_0 = arith.constant 0 : i32
    %c0_i32_1 = arith.constant 0 : i32
    return %c0_i32, %c0_i32_0 : i32, i32
  }
  func.func @transform_2(%arg0: i32, %arg1: i32) -> (i32, i32) {
    %c0_i32 = arith.constant 0 : i32
    %c0_i32_0 = arith.constant 0 : i32
    %c0_i32_1 = arith.constant 0 : i32
    return %c0_i32, %c0_i32_0 : i32, i32
  }
  func.func @transform_3(%arg0: i32, %arg1: i32) -> (i32, i32) {
    %c0_i32 = arith.constant 0 : i32
    %c0_i32_0 = arith.constant 0 : i32
    return %c0_i32, %arg1 : i32, i32
  }
}

</mosaic_0001>

<llo_original>
// kernel: tpu_custom_call.1
$region0: #{tpu_custom_call.1}
  #allocation0 [shape = 'u32[]', space=smem, size = 0x4, offset = 0x4, fixed_abs, tag = 'smem constant byte address 0x4 - core index']
  #allocation1 [shape = 'u32[144,128]{1,0:T(1,128)}', space=vmem, size = 0x12000, scoped, tag = 'internal scratch']
  #allocation2 [shape = 'f32[2,1]{1,0:T(2,128)}', space=vmem, size = 0x400, scoped, tag = 'scratch operand']
  #allocation3 [shape = 'f32[2,1]{1,0:T(2,128)}', space=vmem, size = 0x400, scoped, tag = 'scratch operand']
  %s0 = inlined_call_operand.vmem [shape: bf16[8,256], index: 0, kind: input, shape index: {}]
  %s1 = inlined_call_operand.vmem [shape: bf16[128,8], index: 1, kind: input, shape index: {}]
  %s2 = inlined_call_operand.vmem [shape: bf16[2,128], index: 2, kind: input, shape index: {}]
  %s3 = inlined_call_operand.hbm [shape: f32[2,256], index: 3, kind: output, shape index: {}]
  %s4 = sld [smem:[#allocation0]]
  $region57: #{tpu_custom_call.1} parent=0
    _
  %s6 = ssub.s32 1, %s4
  %s7 = scalar_select 0, %s6, %s4
  $region1: #{tpu_custom_call.1} parent=0
    #allocation4 [shape = 'u8[2048]{0}', space=vmem, size = 0x800, scoped, tag = 'output window, operand 0']
    #allocation5 [shape = 's32[2]{0}', space=sflag, size = 0x8, scoped, tag = 'scoped memory for tpu_custom_call.1']
    %8 = vsyncpa [#allocation5], 0
    %s9 = scalar_lea.sflag [#allocation5], 1
    %10 = vsyncpa %s9, 0
    loop: start=0, step=1, limit=6
    $region2: #{tpu_custom_call.1} parent=1 // loop_pre_header
      _
    $region3: #{tpu_custom_call.1} parent=1 // loop_header
      %s12 = sphi 0, %s16
      %p13 = scmp.ge.s32.totalorder %s12, 6
      %s19 = sphi 0, %s31
      %s20 = sphi 0, %s27
      %s21 = sphi 0, %s19
      %s22 = sphi 0, %s20
      %s23 = sphi 0, %s21
      %s24 = sphi 0, %s22
      %s34 = sphi 0, %s36
      %s37 = sphi 0, %s34
      %s38 = sphi 0, %s37
      %s54 = sphi 0, %s38
      %s58 = sphi 0, %s58
      %s60 = sphi 0, %s58
      %s61 = sphi 0, %s60
      %s75 = sphi 0, %s61
      %s79 = sphi 0, %s79
      %s81 = sphi 0, %s79
      %s82 = sphi 0, %s81
      %s96 = sphi 0, %s82
      %s102 = sphi 0, %s104
      %s105 = sphi 0, %s102
      %s106 = sphi 0, %s105
      %s122 = sphi 0, %s106
    $region4: #{tpu_custom_call.1} parent=1 // loop_header_branch
      %15 = sbr.rel (%p13) target = $region8
    $region5: #{tpu_custom_call.1} parent=1 // loop_body
      %s17 = ssub.s32 %s12, 1
      %s18 = ssub.s32 %s12, 2
      %s25 = sadd.s32 1, %s20
      %p26 = scmp.ge.s32.totalorder %s25, 2
      %s27 = scalar_select %p26, 0, %s25
      %s28 = sadd.s32 1, %s19
      %s29 = scalar_select %p26, %s28, %s19
      %p30 = scmp.ge.s32.totalorder %s29, 2
      %s31 = scalar_select %p30, 0, %s29
      %s32 = ssub.s32 %s20, %s27
      %p33 = scmp.eq.s32.totalorder %s32, 0
      %s35 = sadd.s32 %s34, 1
      %s36 = scalar_select %p33, %s34, %s35
      %p39 = pneg %p33
      %p40 = scmp.eq.s32.totalorder %s12, 3
      %p41 = por %p39, %p40
      %p42 = scmp.ne.s32.totalorder %s34, %s37
      %p43 = scmp.eq.s32.totalorder %s12, 0
      %p44 = por %p42, %p43
      %p45 = scmp.ne.s32.totalorder %s34, %s37
      %p46 = scmp.eq.s32.totalorder %s17, 3
      %p47 = por %p45, %p46
      %p48 = scmp.ne.s32.totalorder %s37, %s38
      %p49 = scmp.eq.s32.totalorder %s17, 0
      %p50 = por %p48, %p49
      %p51 = scmp.ne.s32.totalorder %s37, %s38
      %p52 = scmp.eq.s32.totalorder %s18, 3
      %p53 = por %p51, %p52
      %p55 = scmp.ne.s32.totalorder %s38, %s54
      %p56 = scmp.eq.s32.totalorder %s18, 0
      %p57 = por %p55, %p56
      %s59 = sadd.s32 %s58, 1
      %p62 = scmp.eq.s32.totalorder %s12, 3
      %p63 = scmp.ne.s32.totalorder %s58, %s60
      %p64 = scmp.eq.s32.totalorder %s12, 0
      %p65 = por %p63, %p64
      %p66 = scmp.ne.s32.totalorder %s58, %s60
      %p67 = scmp.eq.s32.totalorder %s17, 3
      %p68 = por %p66, %p67
      %p69 = scmp.ne.s32.totalorder %s60, %s61
      %p70 = scmp.eq.s32.totalorder %s17, 0
      %p71 = por %p69, %p70
      %p72 = scmp.ne.s32.totalorder %s60, %s61
      %p73 = scmp.eq.s32.totalorder %s18, 3
      %p74 = por %p72, %p73
      %p76 = scmp.ne.s32.totalorder %s61, %s75
      %p77 = scmp.eq.s32.totalorder %s18, 0
      %p78 = por %p76, %p77
      %s80 = sadd.s32 %s79, 1
      %p83 = scmp.eq.s32.totalorder %s12, 3
      %p84 = scmp.ne.s32.totalorder %s79, %s81
      %p85 = scmp.eq.s32.totalorder %s12, 0
      %p86 = por %p84, %p85
      %p87 = scmp.ne.s32.totalorder %s79, %s81
      %p88 = scmp.eq.s32.totalorder %s17, 3
      %p89 = por %p87, %p88
      %p90 = scmp.ne.s32.totalorder %s81, %s82
      %p91 = scmp.eq.s32.totalorder %s17, 0
      %p92 = por %p90, %p91
      %p93 = scmp.ne.s32.totalorder %s81, %s82
      %p94 = scmp.eq.s32.totalorder %s18, 3
      %p95 = por %p93, %p94
      %p97 = scmp.ne.s32.totalorder %s82, %s96
      %p98 = scmp.eq.s32.totalorder %s18, 0
      %p99 = por %p97, %p98
      %s100 = ssub.s32 %s20, %s27
      %p101 = scmp.eq.s32.totalorder %s100, 0
      %s103 = sadd.s32 %s102, 1
      %s104 = scalar_select %p101, %s102, %s103
      %p107 = pneg %p101
      %p108 = scmp.eq.s32.totalorder %s12, 3
      %p109 = por %p107, %p108
      %p110 = scmp.ne.s32.totalorder %s102, %s105
      %p111 = scmp.eq.s32.totalorder %s12, 0
      %p112 = por %p110, %p111
      %p113 = scmp.ne.s32.totalorder %s102, %s105
      %p114 = scmp.eq.s32.totalorder %s17, 3
      %p115 = por %p113, %p114
      %p116 = scmp.ne.s32.totalorder %s105, %s106
      %p117 = scmp.eq.s32.totalorder %s17, 0
      %p118 = por %p116, %p117
      %p119 = scmp.ne.s32.totalorder %s105, %s106
      %p120 = scmp.eq.s32.totalorder %s18, 3
      %p121 = por %p119, %p120
      %p123 = scmp.ne.s32.totalorder %s106, %s122
      %p124 = scmp.eq.s32.totalorder %s18, 0
      %p125 = por %p123, %p124
      %p126 = scmp.le.s32.totalorder 1, %s12
      %p127 = scmp.lt.s32.totalorder %s12, 5
      %p128 = pnand %p126, %p127
      %p129 = pneg %p128
      // Predicated region
      $region9: #{tpu_custom_call.1} parent=5 // pred_check
        _
      $region10: #{tpu_custom_call.1} parent=5 // pred_check_branch
        %131 = sbr.rel (%p128) target = $region12
      $region11: #{tpu_custom_call.1} parent=5 // pred_region
        %s132 = ssub.s32 %s12, 1
        // Predicated region
        $region13: #{tpu_custom_call.1} parent=11 // pred_check
          %p133 = pneg %p71
        $region14: #{tpu_custom_call.1} parent=11 // pred_check_branch
          %135 = sbr.rel (%p133) target = $region16
        $region15: #{tpu_custom_call.1} parent=11 // pred_region
          _
        $region16: #{tpu_custom_call.1} parent=11 // pred_fallthru
          _
        // Predicated region
        $region17: #{tpu_custom_call.1} parent=11 // pred_check
          %p136 = pneg %p92
        $region18: #{tpu_custom_call.1} parent=11 // pred_check_branch
          %138 = sbr.rel (%p136) target = $region20
        $region19: #{tpu_custom_call.1} parent=11 // pred_region
          _
        $region20: #{tpu_custom_call.1} parent=11 // pred_fallthru
          _
      $region12: #{tpu_custom_call.1} parent=5 // pred_fallthru
        _
      %p139 = scmp.lt.s32.totalorder %s12, 4
      // Predicated region
      $region21: #{tpu_custom_call.1} parent=5 // pred_check
        %p140 = pneg %p139
      $region22: #{tpu_custom_call.1} parent=5 // pred_check_branch
        %142 = sbr.rel (%p140) target = $region24
      $region23: #{tpu_custom_call.1} parent=5 // pred_region
        // Predicated region
        $region25: #{tpu_custom_call.1} parent=23 // pred_check
          %p143 = pneg %p44
        $region26: #{tpu_custom_call.1} parent=23 // pred_check_branch
          %145 = sbr.rel (%p143) target = $region28
        $region27: #{tpu_custom_call.1} parent=23 // pred_region
          %p146 = scmp.lt.s32.totalorder %s20, 1
          %s147 = scalar_select %p146, %s20, 1
          %s148 = smul.addr %s147, 4
          %s149 = scalar_lea.vmem %s0, %s148
        $region28: #{tpu_custom_call.1} parent=23 // pred_fallthru
          _
      $region24: #{tpu_custom_call.1} parent=5 // pred_fallthru
        _
      %p150 = scmp.le.s32.totalorder 1, %s12
      %p151 = scmp.lt.s32.totalorder %s12, 5
      %p152 = pnand %p150, %p151
      %p153 = pneg %p152
      // Predicated region
      $region29: #{tpu_custom_call.1} parent=5 // pred_check
        _
      $region30: #{tpu_custom_call.1} parent=5 // pred_check_branch
        %155 = sbr.rel (%p152) target = $region32
      $region31: #{tpu_custom_call.1} parent=5 // pred_region
        %s156 = ssub.s32 %s12, 1
        %p157 = scmp.lt.s32.totalorder %s22, 1
        %s158 = scalar_select %p157, %s22, 1
        %s159 = smul.addr %s158, 4
        %s160 = scalar_lea.vmem %s0, %s159
        %p161 = pneg %p50
        %p162 = pneg %p47
        %p163 = pneg %p71
        %p164 = pneg %p68
        %p165 = pneg %p92
        %p166 = pneg %p89
        %p167 = pneg %p118
        %p168 = pneg %p115
        %s169 = sand.u32 %s105, 1
        %s170 = scalar_lea.sflag [#allocation5], %s169
        %s171 = sand.u32 %s105, 1
        %s172 = smul.addr %s171, 2
        %s173 = scalar_lea.vmem [#allocation4], %s172
        %p174 = scmp.lt.s32.totalorder %s22, 1
        %s175 = scalar_select %p174, %s22, 1
        %s176 = smul.addr %s175, 4
        %s177 = scalar_lea.vmem %s0, %s176
        %p179 = scmp.eq.s32.totalorder %s21, 0
        %p180 = scmp.eq.s32.totalorder %s22, 0
        %p181 = pnand %p179, %p180
        %p182 = pneg %p181
        // Predicated region
        $region33: #{tpu_custom_call.1} parent=31 // pred_check
          _
        $region34: #{tpu_custom_call.1} parent=31 // pred_check_branch
          %184 = sbr.rel (%p181) target = $region36
        $region35: #{tpu_custom_call.1} parent=31 // pred_region
          %vm185 = vcmask 1024
          %186 = vst.msk [vmem:[#allocation2] sm:$0x3] %vm185, -inf
          %187 = vst.msk [vmem:[#allocation3] sm:$0x3] %vm185, 0.0
        $region36: #{tpu_custom_call.1} parent=31 // pred_fallthru
          _
        %v188 = vld [vmem:[%s1] sm:$0xf]
        %v189 = vld [vmem:[%s1 + $0x4] sm:$0xf]
        %v190 = vld [vmem:[%s1 + $0x8] sm:$0xf]
        %v191 = vld [vmem:[%s1 + $0xc] sm:$0xf]
        %v192 = vld [vmem:[%s1 + $0x10] sm:$0xf]
        %v193 = vld [vmem:[%s1 + $0x14] sm:$0xf]
        %v194 = vld [vmem:[%s1 + $0x18] sm:$0xf]
        %v195 = vld [vmem:[%s1 + $0x1c] sm:$0xf]
        %v196 = vld [vmem:[%s1 + $0x20] sm:$0xf]
        %v197 = vld [vmem:[%s1 + $0x24] sm:$0xf]
        %v198 = vld [vmem:[%s1 + $0x28] sm:$0xf]
        %v199 = vld [vmem:[%s1 + $0x2c] sm:$0xf]
        %v200 = vld [vmem:[%s1 + $0x30] sm:$0xf]
        %v201 = vld [vmem:[%s1 + $0x34] sm:$0xf]
        %v202 = vld [vmem:[%s1 + $0x38] sm:$0xf]
        %v203 = vld [vmem:[%s1 + $0x3c] sm:$0xf]
        %v204 = vld [vmem:[%s177] sm:$0xf]
        %v221 = vunpack.c.l.b16 %v188
        %v222 = vunpack.c.l.b16 %v189
        %v223 = vunpack.c.l.b16 %v190
        %v224 = vunpack.c.l.b16 %v191
        %v225 = vunpack.c.l.b16 %v192
        %v226 = vunpack.c.l.b16 %v193
        %v227 = vunpack.c.l.b16 %v194
        %v228 = vunpack.c.l.b16 %v195
        %v229 = vunpack.c.l.b16 %v196
        %v230 = vunpack.c.l.b16 %v197
        %v231 = vunpack.c.l.b16 %v198
        %v232 = vunpack.c.l.b16 %v199
        %v233 = vunpack.c.l.b16 %v200
        %v234 = vunpack.c.l.b16 %v201
        %v235 = vunpack.c.l.b16 %v202
        %v236 = vunpack.c.l.b16 %v203
        %v237 = vpack.c.b16 %v222, %v221
        %v238 = vpack.c.b16 %v224, %v223
        %v239 = vpack.c.b16 %v226, %v225
        %v240 = vpack.c.b16 %v228, %v227
        %v241 = vpack.c.b16 %v230, %v229
        %v242 = vpack.c.b16 %v232, %v231
        %v243 = vpack.c.b16 %v234, %v233
        %v244 = vpack.c.b16 %v236, %v235
        %vm245 = vcmask 64512
        %v247 = vsel %vm245, %v237, 0
        %v250 = vsel %vm245, %v238, 0
        %v253 = vsel %vm245, %v239, 0
        %v256 = vsel %vm245, %v240, 0
        %v259 = vsel %vm245, %v241, 0
        %v262 = vsel %vm245, %v242, 0
        %v265 = vsel %vm245, %v243, 0
        %v268 = vsel %vm245, %v244, 0
        %vm270 = vcmask 1043456
        %v272 = vsel %vm270, %v204, 0
        %274 = vmatprep.subr.bf16.mxu0 0
        %275 = vmatpush1.bf16.msra.mxu0 %v272
        %276 = vmatprep.subr.bf16.mxu0 0
        %277 = vmatpush1.bf16.msra.mxu0 0
        %278 = vmatprep.subr.bf16.mxu0 0
        %279 = vmatpush1.bf16.msra.mxu0 0
        %280 = vmatprep.subr.bf16.mxu0 0
        %281 = vmatpush1.bf16.msra.mxu0 0
        %282 = vmatprep.subr.bf16.mxu0 0
        %283 = vmatpush1.bf16.msra.mxu0 0
        %284 = vmatprep.subr.bf16.mxu0 0
        %285 = vmatpush1.bf16.msra.mxu0 0
        %286 = vmatprep.subr.bf16.mxu0 0
        %287 = vmatpush1.bf16.msra.mxu0 0
        %288 = vmatprep.subr.bf16.mxu0 0
        %289 = vmatpush1.bf16.msra.mxu0 0
        %290 = vmatprep.subr.bf16.mxu0 0
        %291 = vmatpush1.bf16.msra.mxu0 0
        %292 = vmatprep.subr.bf16.mxu0 0
        %293 = vmatpush1.bf16.msra.mxu0 0
        %294 = vmatprep.subr.bf16.mxu0 0
        %295 = vmatpush1.bf16.msra.mxu0 0
        %296 = vmatprep.subr.bf16.mxu0 0
        %297 = vmatpush1.bf16.msra.mxu0 0
        %298 = vmatprep.subr.bf16.mxu0 0
        %299 = vmatpush1.bf16.msra.mxu0 0
        %300 = vmatprep.subr.bf16.mxu0 0
        %301 = vmatpush1.bf16.msra.mxu0 0
        %302 = vmatprep.subr.bf16.mxu0 0
        %303 = vmatpush1.bf16.msra.mxu0 0
        %304 = vmatprep.subr.bf16.mxu0 0
        %305 = vmatpush1.bf16.msra.mxu0 0
        %306 = vmatprep.mubr.bf16.mxu0 0
        %307 = vmatmul.mubr.bf16.gmra.mrb[0].mxu0 %v247
        %v308 = vpop.f32.mrb[0].mxu0
        %v309 = vadd.f32 0.0, %v308
        %v310 = vpop.f32.mrb[0].mxu0
        %v311 = vpop.f32.mrb[0].mxu0
        %v312 = vadd.f32 0.0, %v311
        %v313 = vpop.f32.mrb[0].mxu0
        %314 = vmatprep.mubr.bf16.mxu0 0
        %315 = vmatmul.mubr.bf16.gmra.mrb[0].mxu0 %v250
        %v316 = vpop.f32.mrb[0].mxu0
        %v317 = vadd.f32 0.0, %v316
        %v318 = vpop.f32.mrb[0].mxu0
        %v319 = vpop.f32.mrb[0].mxu0
        %v320 = vadd.f32 0.0, %v319
        %v321 = vpop.f32.mrb[0].mxu0
        %322 = vmatprep.mubr.bf16.mxu0 0
        %323 = vmatmul.mubr.bf16.gmra.mrb[0].mxu0 %v253
        %v324 = vpop.f32.mrb[0].mxu0
        %v325 = vadd.f32 0.0, %v324
        %v326 = vpop.f32.mrb[0].mxu0
        %v327 = vpop.f32.mrb[0].mxu0
        %v328 = vadd.f32 0.0, %v327
        %v329 = vpop.f32.mrb[0].mxu0
        %330 = vmatprep.mubr.bf16.mxu0 0
        %331 = vmatmul.mubr.bf16.gmra.mrb[0].mxu0 %v256
        %v332 = vpop.f32.mrb[0].mxu0
        %v333 = vadd.f32 0.0, %v332
        %v334 = vpop.f32.mrb[0].mxu0
        %v335 = vpop.f32.mrb[0].mxu0
        %v336 = vadd.f32 0.0, %v335
        %v337 = vpop.f32.mrb[0].mxu0
        %338 = vmatprep.mubr.bf16.mxu0 0
        %339 = vmatmul.mubr.bf16.gmra.mrb[0].mxu0 %v259
        %v340 = vpop.f32.mrb[0].mxu0
        %v341 = vadd.f32 0.0, %v340
        %v342 = vpop.f32.mrb[0].mxu0
        %v343 = vpop.f32.mrb[0].mxu0
        %v344 = vadd.f32 0.0, %v343
        %v345 = vpop.f32.mrb[0].mxu0
        %346 = vmatprep.mubr.bf16.mxu0 0
        %347 = vmatmul.mubr.bf16.gmra.mrb[0].mxu0 %v262
        %v348 = vpop.f32.mrb[0].mxu0
        %v349 = vadd.f32 0.0, %v348
        %v350 = vpop.f32.mrb[0].mxu0
        %v351 = vpop.f32.mrb[0].mxu0
        %v352 = vadd.f32 0.0, %v351
        %v353 = vpop.f32.mrb[0].mxu0
        %354 = vmatprep.mubr.bf16.mxu0 0
        %355 = vmatmul.mubr.bf16.gmra.mrb[0].mxu0 %v265
        %v356 = vpop.f32.mrb[0].mxu0
        %v357 = vadd.f32 0.0, %v356
        %v358 = vpop.f32.mrb[0].mxu0
        %v359 = vpop.f32.mrb[0].mxu0
        %v360 = vadd.f32 0.0, %v359
        %v361 = vpop.f32.mrb[0].mxu0
        %362 = vmatprep.mubr.bf16.mxu0 0
        %363 = vmatmul.mubr.bf16.gmra.mrb[0].mxu0 %v268
        %v364 = vpop.f32.mrb[0].mxu0
        %v365 = vadd.f32 0.0, %v364
        %v366 = vpop.f32.mrb[0].mxu0
        %v367 = vpop.f32.mrb[0].mxu0
        %v368 = vadd.f32 0.0, %v367
        %v369 = vpop.f32.mrb[0].mxu0
        %370 = vdwg.mxu0
        %v371 = vmax.f32 %v309, 0.0
        %v372 = vmax.f32 %v312, 0.0
        %v373 = vmax.f32 %v317, 0.0
        %v374 = vmax.f32 %v320, 0.0
        %v375 = vmax.f32 %v325, 0.0
        %v376 = vmax.f32 %v328, 0.0
        %v377 = vmax.f32 %v333, 0.0
        %v378 = vmax.f32 %v336, 0.0
        %v379 = vmax.f32 %v341, 0.0
        %v380 = vmax.f32 %v344, 0.0
        %v381 = vmax.f32 %v349, 0.0
        %v382 = vmax.f32 %v352, 0.0
        %v383 = vmax.f32 %v357, 0.0
        %v384 = vmax.f32 %v360, 0.0
        %v385 = vmax.f32 %v365, 0.0
        %v386 = vmax.f32 %v368, 0.0
        %v387 = vld [vmem:[%s2] sm:$0x1]
        %v388 = vpack.c.bf16 %v372, %v371
        %v389 = vpack.c.bf16 %v374, %v373
        %v390 = vpack.c.bf16 %v376, %v375
        %v391 = vpack.c.bf16 %v378, %v377
        %v392 = vpack.c.bf16 %v380, %v379
        %v393 = vpack.c.bf16 %v382, %v381
        %v394 = vpack.c.bf16 %v384, %v383
        %v395 = vpack.c.bf16 %v386, %v385
        %396 = vmatprep.subr.bf16.mxu0 0
        %397 = vmatpush1.bf16.msra.mxu0 %v388
        %398 = vmatprep.subr.bf16.mxu0 0
        %399 = vmatpush1.bf16.msra.mxu0 %v389
        %400 = vmatprep.subr.bf16.mxu0 0
        %401 = vmatpush1.bf16.msra.mxu0 %v390
        %402 = vmatprep.subr.bf16.mxu0 0
        %403 = vmatpush1.bf16.msra.mxu0 %v391
        %404 = vmatprep.subr.bf16.mxu0 0
        %405 = vmatpush1.bf16.msra.mxu0 %v392
        %406 = vmatprep.subr.bf16.mxu0 0
        %407 = vmatpush1.bf16.msra.mxu0 %v393
        %408 = vmatprep.subr.bf16.mxu0 0
        %409 = vmatpush1.bf16.msra.mxu0 %v394
        %410 = vmatprep.subr.bf16.mxu0 0
        %411 = vmatpush1.bf16.msra.mxu0 %v395
        %412 = vmatprep.subr.bf16.mxu0 0
        %413 = vmatpush1.bf16.msra.mxu0 0
        %414 = vmatprep.subr.bf16.mxu0 0
        %415 = vmatpush1.bf16.msra.mxu0 0
        %416 = vmatprep.subr.bf16.mxu0 0
        %417 = vmatpush1.bf16.msra.mxu0 0
        %418 = vmatprep.subr.bf16.mxu0 0
        %419 = vmatpush1.bf16.msra.mxu0 0
        %420 = vmatprep.subr.bf16.mxu0 0
        %421 = vmatpush1.bf16.msra.mxu0 0
        %422 = vmatprep.subr.bf16.mxu0 0
        %423 = vmatpush1.bf16.msra.mxu0 0
        %424 = vmatprep.subr.bf16.mxu0 0
        %425 = vmatpush1.bf16.msra.mxu0 0
        %426 = vmatprep.subr.bf16.mxu0 0
        %427 = vmatpush1.bf16.msra.mxu0 0
        %428 = vmatprep.mubr.bf16.mxu0 0
        %429 = vmatmul.mubr.bf16.gmra.mrb[0].mxu0 %v387
        %v430 = vpop.f32.mrb[0].mxu0
        %v431 = vadd.f32 0.0, %v430
        %v432 = vpop.f32.mrb[0].mxu0
        %v433 = vpop.f32.mrb[0].mxu0
        %v434 = vpop.f32.mrb[0].mxu0
        %435 = vdwg.mxu0
        %s436 = smul.u32 %s22, 128
        %v437 = vlaneseq
        %v438 = vand.u32 %v437, 127
        %v439 = vstv %s436
        %v440 = vadd.s32 %v439, %v438
        %vm441 = vcmp.lt.s32.totalorder %v440, 200
        %v442 = vsel %vm441, %v431, -inf
        // Predicated region
        $region37: #{tpu_custom_call.1} parent=31 // pred_check
          %p443 = pneg %p179
        $region38: #{tpu_custom_call.1} parent=31 // pred_check_branch
          %445 = sbr.rel (%p443) target = $region40
        $region39: #{tpu_custom_call.1} parent=31 // pred_region
          %vm446 = vcmask 1041408
          %v447 = vsel %vm446, %v442, -inf
          %448 = vmax.xlane.f32.xlu0 %v447
          %v449 = vpop.xlane.xlu0 %448
          %v450 = vld [vmem:[#allocation2] sm:$0x3]
          %v451 = vmax.f32 %v450, %v449
          %v452 = vld [vmem:[#allocation3] sm:$0x3]
          %v453 = vsub.f32 %v450, %v451
          %v454 = vmul.f32 %v453, 1.442695
          %v455 = vpow.pop %v454
          %v456 = vmul.f32 %v452, %v455
          %458 = vset.pattern.permute.xlu0 0
          %459 = vperm.xlu0 %458, %v451
          %v460 = vpop.permute.xlu0 %459
          %v462 = vsub.f32 %v442, %v460
          %v463 = vmul.f32 %v462, 1.442695
          %v464 = vpow.pop %v463
          %v465 = vsel %vm446, %v464, 0.0
          %466 = vadd.xlane.f32.xlu0 %v465
          %v467 = vpop.xlane.xlu0 %466
          %v468 = vadd.f32 %v456, %v467
          %vm469 = vcmask 1024
          %470 = vst.msk [vmem:[#allocation3] sm:$0x3] %vm469, %v468
          %471 = vst.msk [vmem:[#allocation2] sm:$0x3] %vm469, %v451
        $region40: #{tpu_custom_call.1} parent=31 // pred_fallthru
          _
        %p472 = scmp.eq.s32.totalorder %s21, 1
        // Predicated region
        $region41: #{tpu_custom_call.1} parent=31 // pred_check
          %p473 = pneg %p472
        $region42: #{tpu_custom_call.1} parent=31 // pred_check_branch
          %475 = sbr.rel (%p473) target = $region44
        $region43: #{tpu_custom_call.1} parent=31 // pred_region
          %v476 = vld [vmem:[#allocation3] sm:$0x3]
          %v477 = vrcp.pop %v476
          %v478 = vmul.f32 %v476, %v477
          %v479 = vsub.f32 2.0, %v478
          %v480 = vmul.f32 %v477, %v479
          %v481 = vld [vmem:[#allocation2] sm:$0x3]
          %483 = vset.pattern.permute.xlu0 0
          %484 = vperm.xlu0 %483, %v481
          %v485 = vpop.permute.xlu0 %484
          %v487 = vsub.f32 %v442, %v485
          %v488 = vmul.f32 %v487, 1.442695
          %v489 = vpow.pop %v488
          %491 = vset.pattern.permute.xlu0 0
          %492 = vperm.xlu0 %491, %v480
          %v493 = vpop.permute.xlu0 %492
          %v495 = vmul.f32 %v489, %v493
          %496 = vst [vmem:[%s173] sm:$0x3] %v495
        $region44: #{tpu_custom_call.1} parent=31 // pred_fallthru
          _
        %s497 = sand.u32 %s105, 1
        %s498 = scalar_lea.sflag [#allocation5], %s497
        %s499 = sand.u32 %s105, 1
        %s500 = smul.addr %s499, 2
        %s501 = scalar_lea.vmem [#allocation4], %s500
        // Predicated region
        $region45: #{tpu_custom_call.1} parent=31 // pred_check
          %p502 = pneg %p115
        $region46: #{tpu_custom_call.1} parent=31 // pred_check_branch
          %504 = sbr.rel (%p502) target = $region48
        $region47: #{tpu_custom_call.1} parent=31 // pred_region
          %s506 = ssub.s32 32, 32
          %507 = vsyncadd %s498, %s506
          %s508 = smul.addr %s22, 32
          %s509 = scalar_lea.hbm %s3, %s508
          %s511 = sshll.u32 %s501, 4
          %s512 = int_to_ptr.vmem [resolvable:$true] %s511
          %514 = dma.vmem_to_hbm [thread:$0]  %s512, 32, %s509, %s498
        $region48: #{tpu_custom_call.1} parent=31 // pred_fallthru
          _
      $region32: #{tpu_custom_call.1} parent=5 // pred_fallthru
        _
      %p515 = scmp.le.s32.totalorder 2, %s12
      // Predicated region
      $region49: #{tpu_custom_call.1} parent=5 // pred_check
        %p516 = pneg %p515
      $region50: #{tpu_custom_call.1} parent=5 // pred_check_branch
        %518 = sbr.rel (%p516) target = $region52
      $region51: #{tpu_custom_call.1} parent=5 // pred_region
        %s519 = ssub.s32 %s12, 2
        // Predicated region
        $region53: #{tpu_custom_call.1} parent=51 // pred_check
          %p520 = pneg %p121
        $region54: #{tpu_custom_call.1} parent=51 // pred_check_branch
          %522 = sbr.rel (%p520) target = $region56
        $region55: #{tpu_custom_call.1} parent=51 // pred_region
          %s523 = sand.u32 %s106, 1
          %s524 = scalar_lea.sflag [#allocation5], %s523
          %s525 = sand.u32 %s106, 1
          %s526 = smul.addr %s525, 2
          %s527 = scalar_lea.vmem [#allocation4], %s526
          %528 = dma.done %s524, 32
        $region56: #{tpu_custom_call.1} parent=51 // pred_fallthru
          _
      $region52: #{tpu_custom_call.1} parent=5 // pred_fallthru
        _
    $region6: #{tpu_custom_call.1} parent=1 // loop_footer
      %s16 = sadd.s32 1, %s12
    $region7: #{tpu_custom_call.1} parent=1 // loop_footer_branch
      %11 = sbr.rel target = $region3
    $region8: #{tpu_custom_call.1} parent=1 // loop_exit
      _
    %529 = vsyncpa [#allocation5], 1
    %s530 = scalar_lea.sflag [#allocation5], 1
    %531 = vsyncpa %s530, 1

</llo_original>
